<compile_context>
chip_gen: v5e
topology: v5e:2x2
jax: 0.10.0
libtpu: 0.0.40
codegen_flags: <defaults>
</compile_context>

<pallas_src>
import jax
import jax.numpy as jnp
from jax import lax
from jax.experimental import pallas as pl
from jax.experimental.pallas import tpu as pltpu


def _gat_e_kernel(eh_ref, et_ref, rel_ref, xeT_ref, wT_ref, a_ref, out_ref,
                  xr_sc, m1_sc, m2_sc, l1_sc, l2_sc, acc_sc):
    """One edge-tile step of the streaming GAT_E reduction.

    Layouts (sublanes x lanes):
      xr_sc  : [F, N]   projected node features [xh; xt] (+ 8 scalar/pad rows)
      gh/gt  : [F, TE]  features of head/tail node per edge (edges on lanes)
      acc_sc : [R, F]   running softmax numerators (cols [0,H)=head1, [H,2H)=head2)
      m*/l*  : [R, 1]   running per-relation max / exp-sum per attention head
    """
    f32 = jnp.float32
    i = pl.program_id(0)
    F, N = xr_sc.shape
    TE = eh_ref.shape[1]
    R, H = out_ref.shape
    H2 = 2 * H

    # ---- init + fused projection (runs once, tile 0) -------------------------
    @pl.when(i == 0)
    def _init():
        # [2H, e_hid] @ [e_hid, N] -> stacked [xh^T; xt^T]
        xrT = jnp.dot(wT_ref[...], xeT_ref[...], preferred_element_type=f32)
        # per-node attention scalars (a_h1.xh, a_h2.xt, a_t1.xh, a_t2.xt) as
        # 4 extra rows (+4 zero pad rows) -> gathered for free with the features.
        pT = jnp.dot(a_ref[...], xrT, preferred_element_type=f32)        # [8, N]
        xr_sc[0:H2, :] = xrT
        xr_sc[H2:F, :] = pT
        m1_sc[...] = jnp.full_like(m1_sc, -1e30)
        m2_sc[...] = jnp.full_like(m2_sc, -1e30)
        l1_sc[...] = jnp.zeros_like(l1_sc)
        l2_sc[...] = jnp.zeros_like(l2_sc)
        acc_sc[...] = jnp.zeros_like(acc_sc)

    # ---- per-tile edge work --------------------------------------------------
    eh = eh_ref[...]                                   # [1, TE] int32 (edges on lanes)
    et = et_ref[...]
    rl = rel_ref[...]

    node_ids = lax.broadcasted_iota(jnp.int32, (N, TE), 0)
    ohT = (node_ids == eh).astype(f32)                 # [N, TE] one-hot(head node)
    otT = (node_ids == et).astype(f32)                 # [N, TE] one-hot(tail node)
    rel_ids = lax.broadcasted_iota(jnp.int32, (R, TE), 0)
    seg_mask = rel_ids == rl                           # [R, TE] bool
    orT = seg_mask.astype(f32)                         # [R, TE] one-hot(relation)

    xr_ext = xr_sc[...]                                # [F, N]
    # Wide gathers: features + attention scalars of head/tail node per edge.
    gh = jnp.dot(xr_ext, ohT, preferred_element_type=f32)   # [F, TE]
    gt = jnp.dot(xr_ext, otT, preferred_element_type=f32)   # [F, TE]

    # attention logits per edge (rows H2..H2+3 hold s_h1, s_h2, s_t1, s_t2)
    e1 = gh[H2:H2 + 1, :] + gt[H2 + 1:H2 + 2, :]       # [1, TE]
    e2 = gh[H2 + 2:H2 + 3, :] + gt[H2 + 3:H2 + 4, :]   # [1, TE]
    z1 = jnp.where(e1 > 0, e1, 0.01 * e1)              # leaky_relu, slope 0.01
    z2 = jnp.where(e2 > 0, e2, 0.01 * e2)

    neg = jnp.float32(-1e30)
    m1_old = m1_sc[...]                                # [R, 1]
    m2_old = m2_sc[...]
    m1_new = jnp.maximum(m1_old,
                         jnp.max(jnp.where(seg_mask, z1, neg), axis=1, keepdims=True))
    m2_new = jnp.maximum(m2_old,
                         jnp.max(jnp.where(seg_mask, z2, neg), axis=1, keepdims=True))
    m1_sc[...] = m1_new
    m2_sc[...] = m2_new

    # gather running max back per edge:  pm[j] = m_new[rel_j]
    pm1 = jnp.sum(orT * m1_new, axis=0, keepdims=True)      # [1, TE]
    pm2 = jnp.sum(orT * m2_new, axis=0, keepdims=True)
    # min(.,0) is a no-op for real edges (z <= pm) and guards padded edges.
    p1 = jnp.exp(jnp.minimum(z1 - pm1, 0.0))                 # [1, TE]
    p2 = jnp.exp(jnp.minimum(z2 - pm2, 0.0))

    # rescale carried sums / accumulator (flash-style)
    s1 = jnp.exp(m1_old - m1_new)                            # [R, 1]
    s2 = jnp.exp(m2_old - m2_new)
    l1_sc[...] = l1_sc[...] * s1 + jnp.sum(orT * p1, axis=1, keepdims=True)
    l2_sc[...] = l2_sc[...] * s2 + jnp.sum(orT * p2, axis=1, keepdims=True)

    # weighted gathered features:  rows [0,H): p1 * xh[eh],  rows [H,2H): p2 * xt[et]
    row_ids = lax.broadcasted_iota(jnp.int32, (F, TE), 0)
    w1 = jnp.where(row_ids < H, p1, 0.0)
    w2 = jnp.where((row_ids >= H) & (row_ids < H2), p2, 0.0)
    feat = gh * w1 + gt * w2                                 # [F, TE]

    # fused scatter-add per relation: [R,TE] x [F,TE]^T -> [R, F]
    contrib = lax.dot_general(orT, feat, (((1,), (1,)), ((), ())),
                              preferred_element_type=f32)
    lane_ids = lax.broadcasted_iota(jnp.int32, (R, F), 1)
    acc_scale = jnp.where(lane_ids < H, s1, s2)              # [R, F]
    acc_sc[...] = acc_sc[...] * acc_scale + contrib

    # ---- finalize (last tile): divide by per-relation denominators ----------
    @pl.when(i == pl.num_programs(0) - 1)
    def _fin():
        acc = acc_sc[...]
        inv1 = 1.0 / (l1_sc[...] + 1e-16)                    # [R, 1]
        inv2 = 1.0 / (l2_sc[...] + 1e-16)
        out_ref[...] = acc[:, 0:H] * inv1 + acc[:, H:H2] * inv2


def gat_e_forward(x_e, edge_index, rel, params, num_rel, *, edge_tile=128):
    """Pallas implementation of GAT_E.forward. Returns [num_rel, r_hidden]."""
    wh, wt, A = params["wh"], params["wt"], params["A"]      # wh/wt: [e_hid, H], A: [H, 4]
    e_hidden, r_hidden = wh.shape
    N = x_e.shape[0]
    E = edge_index.shape[1]
    R, H = int(num_rel), int(r_hidden)
    F = 2 * H + 8                                            # features + scalar/pad rows

    eh = edge_index[0].astype(jnp.int32)
    et = edge_index[1].astype(jnp.int32)
    rl = rel.astype(jnp.int32)

    TE = int(edge_tile)
    num_tiles = (E + TE - 1) // TE
    Ep = num_tiles * TE
    pad = Ep - E
    # Pad indices: node index 0 (valid gather target), relation index R (sentinel
    # that matches no one-hot row -> padded edges contribute nothing).
    eh_p = jnp.pad(eh, (0, pad))[None, :]                    # [1, Ep]
    et_p = jnp.pad(et, (0, pad))[None, :]
    rel_p = jnp.pad(rl, (0, pad), constant_values=R)[None, :]

    # Layout plumbing (wrapper-side transposes of small operands):
    xeT = x_e.astype(jnp.float32).T                          # [e_hid, N]
    wT = jnp.concatenate([wh, wt], axis=1).T.astype(jnp.float32)   # [2H, e_hid]

    a_h1, a_h2, a_t1, a_t2 = A[:, 0], A[:, 1], A[:, 2], A[:, 3]
    zH = jnp.zeros((H,), jnp.float32)
    a_pack = jnp.stack([
        jnp.concatenate([a_h1, zH]),     # s_h1 = a_h1 . xh
        jnp.concatenate([zH, a_h2]),     # s_h2 = a_h2 . xt
        jnp.concatenate([a_t1, zH]),     # s_t1 = a_t1 . xh
        jnp.concatenate([zH, a_t2]),     # s_t2 = a_t2 . xt
    ] + [jnp.zeros((2 * H,), jnp.float32)] * 4, axis=0)      # [8, 2H]

    idx_spec = pl.BlockSpec((1, TE), lambda i: (0, i))
    full = lambda arr: pl.BlockSpec(arr.shape, lambda i: (0, 0))

    return pl.pallas_call(
        _gat_e_kernel,
        grid=(num_tiles,),
        in_specs=[idx_spec, idx_spec, idx_spec,
                  full(xeT), full(wT), full(a_pack)],
        out_specs=pl.BlockSpec((R, H), lambda i: (0, 0)),
        out_shape=jax.ShapeDtypeStruct((R, H), jnp.float32),
        scratch_shapes=[
            pltpu.VMEM((F, N), jnp.float32),   # projected node features + scalars
            pltpu.VMEM((R, 1), jnp.float32),   # running max, head 1
            pltpu.VMEM((R, 1), jnp.float32),   # running max, head 2
            pltpu.VMEM((R, 1), jnp.float32),   # running exp-sum, head 1
            pltpu.VMEM((R, 1), jnp.float32),   # running exp-sum, head 2
            pltpu.VMEM((R, F), jnp.float32),   # running numerators [head1 | head2]
        ],
        compiler_params=pltpu.CompilerParams(
            dimension_semantics=("arbitrary",),          # carried reduction over edge tiles
            vmem_limit_bytes=64 * 1024 * 1024),
    )(eh_p, et_p, rel_p, xeT, wT, a_pack)


def _ref_forward(x_e, edge_index, rel, params, num_rel):
    """Pure-JAX reference matching the PyTorch semantics."""
    wh, wt, A = params["wh"], params["wt"], params["A"]
    eh, et = edge_index[0], edge_index[1]
    xh = x_e @ wh
    xt = x_e @ wt
    ph = xh @ A
    pt = xt @ A
    e1 = ph[eh, 0] + pt[et, 1]
    e2 = ph[eh, 2] + pt[et, 3]

    def lrelu(v):
        return jnp.where(v > 0, v, 0.01 * v)

    def seg_softmax(z):
        smax = jnp.full((num_rel,), -jnp.inf, jnp.float32).at[rel].max(z)
        ex = jnp.exp(z - smax[rel])
        ssum = jnp.zeros((num_rel,), jnp.float32).at[rel].add(ex)
        return ex / (ssum[rel] + 1e-16)

    a1 = seg_softmax(lrelu(e1))
    a2 = seg_softmax(lrelu(e2))
    r_hidden = wh.shape[1]
    out1 = jnp.zeros((num_rel, r_hidden), jnp.float32).at[rel].add(a1[:, None] * xh[eh])
    out2 = jnp.zeros((num_rel, r_hidden), jnp.float32).at[rel].add(a2[:, None] * xt[et])
    return out1 + out2


def init_params(key, e_hidden, r_hidden):
    """Deterministic synthetic init (shapes follow nn.Linear in GAT_E)."""
    k1, k2, k3, k4, k5, k6 = jax.random.split(key, 6)
    b_w = 1.0 / jnp.sqrt(e_hidden)
    b_a = 1.0 / jnp.sqrt(r_hidden)
    # w_h / w_t: torch weight is [r_hidden, e_hidden]; store transposed [e_hidden, r_hidden].
    wh = jax.random.uniform(k1, (e_hidden, r_hidden), jnp.float32, -b_w, b_w)
    wt = jax.random.uniform(k2, (e_hidden, r_hidden), jnp.float32, -b_w, b_w)
    # a_h1, a_h2, a_t1, a_t2: each [1, r_hidden]; stack as columns [r_hidden, 4].
    a_h1 = jax.random.uniform(k3, (r_hidden,), jnp.float32, -b_a, b_a)
    a_h2 = jax.random.uniform(k4, (r_hidden,), jnp.float32, -b_a, b_a)
    a_t1 = jax.random.uniform(k5, (r_hidden,), jnp.float32, -b_a, b_a)
    a_t2 = jax.random.uniform(k6, (r_hidden,), jnp.float32, -b_a, b_a)
    A = jnp.stack([a_h1, a_h2, a_t1, a_t2], axis=1)          # [r_hidden, 4]
    return {"wh": wh, "wt": wt, "A": A}


if __name__ == "__main__":
    N, E_HID, R_HID = 16, 32, 32      # nodes, e_hidden, r_hidden
    E, R = 200, 8                     # edges (non multiple of tile -> exercises padding), relations

    key = jax.random.PRNGKey(0)
    kx, ke, kt, kr, kp = jax.random.split(key, 5)

    x_e = jax.random.normal(kx, (N, E_HID), jnp.float32)
    edge_h = jax.random.randint(ke, (E,), 0, N, dtype=jnp.int32)
    edge_t = jax.random.randint(kt, (E,), 0, N, dtype=jnp.int32)
    edge_index = jnp.stack([edge_h, edge_t], axis=0)          # [2, E]
    rel = jax.random.randint(kr, (E,), 0, R, dtype=jnp.int32)
    rel = rel.at[0].set(R - 1)                                # ensure rel.max()+1 == R

    params = init_params(kp, E_HID, R_HID)

    out = gat_e_forward(x_e, edge_index, rel, params, R, edge_tile=128)
    out = jax.block_until_ready(out)

    ref = jax.block_until_ready(_ref_forward(x_e, edge_index, rel, params, R))

    assert out.shape == (R, R_HID)
    assert jnp.allclose(out, ref, rtol=1e-3, atol=1e-3), "mismatch vs reference"

    print("KERNEL_OK")
</pallas_src>

<mosaic_0001>
module attributes {stable_mosaic.version = 11 : i64} {
  func.func @_gat_e_kernel(%arg0: i32, %arg1: memref<1x128xi32, #tpu.memory_space<vmem>>, %arg2: memref<1x128xi32, #tpu.memory_space<vmem>>, %arg3: memref<1x128xi32, #tpu.memory_space<vmem>>, %arg4: memref<32x16xf32, #tpu.memory_space<vmem>>, %arg5: memref<64x32xf32, #tpu.memory_space<vmem>>, %arg6: memref<8x64xf32, #tpu.memory_space<vmem>>, %arg7: memref<8x32xf32, #tpu.memory_space<vmem>>, %arg8: memref<72x16xf32, #tpu.memory_space<vmem>>, %arg9: memref<8x1xf32, #tpu.memory_space<vmem>>, %arg10: memref<8x1xf32, #tpu.memory_space<vmem>>, %arg11: memref<8x1xf32, #tpu.memory_space<vmem>>, %arg12: memref<8x1xf32, #tpu.memory_space<vmem>>, %arg13: memref<8x72xf32, #tpu.memory_space<vmem>>) attributes {dimension_semantics = [#tpu.dimension_semantics<arbitrary>], iteration_bounds = array<i64: 2>, scalar_prefetch = 0 : i64, scratch_operands = 6 : i64, tpu.core_type = #tpu.core_type<tc>, window_params = [{transform_indices = @transform_0, window_bounds = array<i64: 1, 128>}, {transform_indices = @transform_1, window_bounds = array<i64: 1, 128>}, {transform_indices = @transform_2, window_bounds = array<i64: 1, 128>}, {pipeline_mode = #tpu.pipeline_mode<synchronous>, transform_indices = @transform_3, window_bounds = array<i64: 32, 16>}, {pipeline_mode = #tpu.pipeline_mode<synchronous>, transform_indices = @transform_4, window_bounds = array<i64: 64, 32>}, {pipeline_mode = #tpu.pipeline_mode<synchronous>, transform_indices = @transform_5, window_bounds = array<i64: 8, 64>}, {pipeline_mode = #tpu.pipeline_mode<synchronous>, transform_indices = @transform_6, window_bounds = array<i64: 8, 32>}]} {
    %c0_i32 = arith.constant 0 : i32
    %0 = arith.cmpi eq, %arg0, %c0_i32 : i32
    %1 = arith.extui %0 : i1 to i32
    %c0_i32_0 = arith.constant 0 : i32
    %2 = arith.cmpi ne, %1, %c0_i32_0 : i32
    scf.if %2 {
      %c0_49 = arith.constant 0 : index
      %c0_50 = arith.constant 0 : index
      %128 = vector.load %arg5[%c0_49, %c0_50] : memref<64x32xf32, #tpu.memory_space<vmem>>, vector<64x32xf32>
      %c0_51 = arith.constant 0 : index
      %c0_52 = arith.constant 0 : index
      %129 = vector.load %arg4[%c0_51, %c0_52] : memref<32x16xf32, #tpu.memory_space<vmem>>, vector<32x16xf32>
      %cst_53 = arith.constant dense<0.000000e+00> : vector<64x16xf32>
      %130 = tpu.matmul %128, %129, %cst_53 {dimension_numbers = #tpu.dot_dimension_numbers<[1], [0], [0], [1], [0, 0, 1, 1], [], []>} : vector<64x32xf32>, vector<32x16xf32>, vector<64x16xf32> -> vector<64x16xf32>
      %c0_54 = arith.constant 0 : index
      %c0_55 = arith.constant 0 : index
      %131 = vector.load %arg6[%c0_54, %c0_55] : memref<8x64xf32, #tpu.memory_space<vmem>>, vector<8x64xf32>
      %cst_56 = arith.constant dense<0.000000e+00> : vector<8x16xf32>
      %132 = tpu.matmul %131, %130, %cst_56 {dimension_numbers = #tpu.dot_dimension_numbers<[1], [0], [0], [1], [0, 0, 1, 1], [], []>} : vector<8x64xf32>, vector<64x16xf32>, vector<8x16xf32> -> vector<8x16xf32>
      %c0_57 = arith.constant 0 : index
      %c0_58 = arith.constant 0 : index
      %133 = vector.load %arg8[%c0_57, %c0_58] : memref<72x16xf32, #tpu.memory_space<vmem>>, vector<64x16xf32>
      tpu.vector_store %arg8[%c0_57, %c0_58], %130 {strides = array<i32>} : memref<72x16xf32, #tpu.memory_space<vmem>>, vector<64x16xf32>,
      %c64 = arith.constant 64 : index
      %c0_59 = arith.constant 0 : index
      %134 = vector.load %arg8[%c64, %c0_59] : memref<72x16xf32, #tpu.memory_space<vmem>>, vector<8x16xf32>
      tpu.vector_store %arg8[%c64, %c0_59], %132 {strides = array<i32>} : memref<72x16xf32, #tpu.memory_space<vmem>>, vector<8x16xf32>,
      %cst_60 = arith.constant -1.000000e+30 : f32
      %135 = vector.broadcast %cst_60 : f32 to vector<8x1xf32>
      %c0_61 = arith.constant 0 : index
      %c0_62 = arith.constant 0 : index
      %136 = vector.load %arg9[%c0_61, %c0_62] : memref<8x1xf32, #tpu.memory_space<vmem>>, vector<8x1xf32>
      tpu.vector_store %arg9[%c0_61, %c0_62], %135 {strides = array<i32>} : memref<8x1xf32, #tpu.memory_space<vmem>>, vector<8x1xf32>,
      %cst_63 = arith.constant -1.000000e+30 : f32
      %137 = vector.broadcast %cst_63 : f32 to vector<8x1xf32>
      %c0_64 = arith.constant 0 : index
      %c0_65 = arith.constant 0 : index
      %138 = vector.load %arg10[%c0_64, %c0_65] : memref<8x1xf32, #tpu.memory_space<vmem>>, vector<8x1xf32>
      tpu.vector_store %arg10[%c0_64, %c0_65], %137 {strides = array<i32>} : memref<8x1xf32, #tpu.memory_space<vmem>>, vector<8x1xf32>,
      %cst_66 = arith.constant 0.000000e+00 : f32
      %139 = vector.broadcast %cst_66 : f32 to vector<8x1xf32>
      %c0_67 = arith.constant 0 : index
      %c0_68 = arith.constant 0 : index
      %140 = vector.load %arg11[%c0_67, %c0_68] : memref<8x1xf32, #tpu.memory_space<vmem>>, vector<8x1xf32>
      tpu.vector_store %arg11[%c0_67, %c0_68], %139 {strides = array<i32>} : memref<8x1xf32, #tpu.memory_space<vmem>>, vector<8x1xf32>,
      %cst_69 = arith.constant 0.000000e+00 : f32
      %141 = vector.broadcast %cst_69 : f32 to vector<8x1xf32>
      %c0_70 = arith.constant 0 : index
      %c0_71 = arith.constant 0 : index
      %142 = vector.load %arg12[%c0_70, %c0_71] : memref<8x1xf32, #tpu.memory_space<vmem>>, vector<8x1xf32>
      tpu.vector_store %arg12[%c0_70, %c0_71], %141 {strides = array<i32>} : memref<8x1xf32, #tpu.memory_space<vmem>>, vector<8x1xf32>,
      %cst_72 = arith.constant 0.000000e+00 : f32
      %143 = vector.broadcast %cst_72 : f32 to vector<8x72xf32>
      %c0_73 = arith.constant 0 : index
      %c0_74 = arith.constant 0 : index
      %144 = vector.load %arg13[%c0_73, %c0_74] : memref<8x72xf32, #tpu.memory_space<vmem>>, vector<8x72xf32>
      tpu.vector_store %arg13[%c0_73, %c0_74], %143 {strides = array<i32>} : memref<8x72xf32, #tpu.memory_space<vmem>>, vector<8x72xf32>,
    } else {
    }
    %c0 = arith.constant 0 : index
    %c0_1 = arith.constant 0 : index
    %3 = vector.load %arg1[%c0, %c0_1] : memref<1x128xi32, #tpu.memory_space<vmem>>, vector<1x128xi32>
    %c0_2 = arith.constant 0 : index
    %c0_3 = arith.constant 0 : index
    %4 = vector.load %arg2[%c0_2, %c0_3] : memref<1x128xi32, #tpu.memory_space<vmem>>, vector<1x128xi32>
    %c0_4 = arith.constant 0 : index
    %c0_5 = arith.constant 0 : index
    %5 = vector.load %arg3[%c0_4, %c0_5] : memref<1x128xi32, #tpu.memory_space<vmem>>, vector<1x128xi32>
    %6 = tpu.iota {dimensions = array<i32: 0>} : vector<16x128xi32>
    %7 = vector.broadcast %3 : vector<1x128xi32> to vector<16x128xi32>
    %8 = arith.cmpi eq, %6, %7 : vector<16x128xi32>
    %9 = arith.extui %8 : vector<16x128xi1> to vector<16x128xi32>
    %10 = arith.sitofp %9 : vector<16x128xi32> to vector<16x128xf32>
    %11 = vector.broadcast %4 : vector<1x128xi32> to vector<16x128xi32>
    %12 = arith.cmpi eq, %6, %11 : vector<16x128xi32>
    %13 = arith.extui %12 : vector<16x128xi1> to vector<16x128xi32>
    %14 = arith.sitofp %13 : vector<16x128xi32> to vector<16x128xf32>
    %15 = tpu.iota {dimensions = array<i32: 0>} : vector<8x128xi32>
    %16 = vector.broadcast %5 : vector<1x128xi32> to vector<8x128xi32>
    %17 = arith.cmpi eq, %15, %16 : vector<8x128xi32>
    %18 = arith.extui %17 : vector<8x128xi1> to vector<8x128xi32>
    %19 = arith.sitofp %18 : vector<8x128xi32> to vector<8x128xf32>
    %c0_6 = arith.constant 0 : index
    %c0_7 = arith.constant 0 : index
    %20 = vector.load %arg8[%c0_6, %c0_7] : memref<72x16xf32, #tpu.memory_space<vmem>>, vector<72x16xf32>
    %cst = arith.constant dense<0.000000e+00> : vector<72x128xf32>
    %21 = tpu.matmul %20, %10, %cst {dimension_numbers = #tpu.dot_dimension_numbers<[1], [0], [0], [1], [0, 0, 1, 1], [], []>} : vector<72x16xf32>, vector<16x128xf32>, vector<72x128xf32> -> vector<72x128xf32>
    %cst_8 = arith.constant dense<0.000000e+00> : vector<72x128xf32>
    %22 = tpu.matmul %20, %14, %cst_8 {dimension_numbers = #tpu.dot_dimension_numbers<[1], [0], [0], [1], [0, 0, 1, 1], [], []>} : vector<72x16xf32>, vector<16x128xf32>, vector<72x128xf32> -> vector<72x128xf32>
    %23 = vector.extract_strided_slice %21 {offsets = [64, 0], sizes = [1, 128], strides = [1, 1]} : vector<72x128xf32> to vector<1x128xf32>
    %24 = vector.extract_strided_slice %22 {offsets = [65, 0], sizes = [1, 128], strides = [1, 1]} : vector<72x128xf32> to vector<1x128xf32>
    %25 = arith.addf %23, %24 : vector<1x128xf32>
    %26 = vector.extract_strided_slice %21 {offsets = [66, 0], sizes = [1, 128], strides = [1, 1]} : vector<72x128xf32> to vector<1x128xf32>
    %27 = vector.extract_strided_slice %22 {offsets = [67, 0], sizes = [1, 128], strides = [1, 1]} : vector<72x128xf32> to vector<1x128xf32>
    %28 = arith.addf %26, %27 : vector<1x128xf32>
    %cst_9 = arith.constant 0.000000e+00 : f32
    %29 = vector.broadcast %cst_9 : f32 to vector<1x128xf32>
    %30 = arith.cmpf ogt, %25, %29 : vector<1x128xf32>
    %cst_10 = arith.constant 0.00999999977 : f32
    %31 = vector.broadcast %cst_10 : f32 to vector<1x128xf32>
    %32 = arith.mulf %31, %25 : vector<1x128xf32>
    %33 = arith.select %30, %25, %32 : vector<1x128xi1>, vector<1x128xf32>
    %cst_11 = arith.constant 0.000000e+00 : f32
    %34 = vector.broadcast %cst_11 : f32 to vector<1x128xf32>
    %35 = arith.cmpf ogt, %28, %34 : vector<1x128xf32>
    %cst_12 = arith.constant 0.00999999977 : f32
    %36 = vector.broadcast %cst_12 : f32 to vector<1x128xf32>
    %37 = arith.mulf %36, %28 : vector<1x128xf32>
    %38 = arith.select %35, %28, %37 : vector<1x128xi1>, vector<1x128xf32>
    %c0_13 = arith.constant 0 : index
    %c0_14 = arith.constant 0 : index
    %39 = vector.load %arg9[%c0_13, %c0_14] : memref<8x1xf32, #tpu.memory_space<vmem>>, vector<8x1xf32>
    %c0_15 = arith.constant 0 : index
    %c0_16 = arith.constant 0 : index
    %40 = vector.load %arg10[%c0_15, %c0_16] : memref<8x1xf32, #tpu.memory_space<vmem>>, vector<8x1xf32>
    %cst_17 = arith.constant -1.000000e+30 : f32
    %41 = vector.shape_cast %33 : vector<1x128xf32> to vector<1x128xf32>
    %42 = vector.broadcast %41 : vector<1x128xf32> to vector<8x128xf32>
    %43 = vector.broadcast %cst_17 : f32 to vector<8x128xf32>
    %44 = arith.select %17, %42, %43 : vector<8x128xi1>, vector<8x128xf32>
    %cst_18 = arith.constant dense<0xFF800000> : vector<8xf32>
    %45 = vector.multi_reduction <maximumf>, %44, %cst_18 [1] : vector<8x128xf32> to vector<8xf32>
    %46 = vector.shape_cast %45 : vector<8xf32> to vector<8x1xf32>
    %47 = arith.maximumf %39, %46 : vector<8x1xf32>
    %cst_19 = arith.constant -1.000000e+30 : f32
    %48 = vector.shape_cast %38 : vector<1x128xf32> to vector<1x128xf32>
    %49 = vector.broadcast %48 : vector<1x128xf32> to vector<8x128xf32>
    %50 = vector.broadcast %cst_19 : f32 to vector<8x128xf32>
    %51 = arith.select %17, %49, %50 : vector<8x128xi1>, vector<8x128xf32>
    %cst_20 = arith.constant dense<0xFF800000> : vector<8xf32>
    %52 = vector.multi_reduction <maximumf>, %51, %cst_20 [1] : vector<8x128xf32> to vector<8xf32>
    %53 = vector.shape_cast %52 : vector<8xf32> to vector<8x1xf32>
    %54 = arith.maximumf %40, %53 : vector<8x1xf32>
    %c0_21 = arith.constant 0 : index
    %c0_22 = arith.constant 0 : index
    %55 = vector.load %arg9[%c0_21, %c0_22] : memref<8x1xf32, #tpu.memory_space<vmem>>, vector<8x1xf32>
    tpu.vector_store %arg9[%c0_21, %c0_22], %47 {strides = array<i32>} : memref<8x1xf32, #tpu.memory_space<vmem>>, vector<8x1xf32>,
    %c0_23 = arith.constant 0 : index
    %c0_24 = arith.constant 0 : index
    %56 = vector.load %arg10[%c0_23, %c0_24] : memref<8x1xf32, #tpu.memory_space<vmem>>, vector<8x1xf32>
    tpu.vector_store %arg10[%c0_23, %c0_24], %54 {strides = array<i32>} : memref<8x1xf32, #tpu.memory_space<vmem>>, vector<8x1xf32>,
    %57 = vector.broadcast %47 : vector<8x1xf32> to vector<8x128xf32>
    %58 = arith.mulf %19, %57 : vector<8x128xf32>
    %cst_25 = arith.constant dense<0.000000e+00> : vector<128xf32>
    %59 = vector.multi_reduction <add>, %58, %cst_25 [0] : vector<8x128xf32> to vector<128xf32>
    %60 = vector.shape_cast %59 : vector<128xf32> to vector<1x128xf32>
    %61 = vector.broadcast %54 : vector<8x1xf32> to vector<8x128xf32>
    %62 = arith.mulf %19, %61 : vector<8x128xf32>
    %cst_26 = arith.constant dense<0.000000e+00> : vector<128xf32>
    %63 = vector.multi_reduction <add>, %62, %cst_26 [0] : vector<8x128xf32> to vector<128xf32>
    %64 = vector.shape_cast %63 : vector<128xf32> to vector<1x128xf32>
    %65 = arith.subf %33, %60 : vector<1x128xf32>
    %cst_27 = arith.constant 0.000000e+00 : f32
    %66 = vector.broadcast %cst_27 : f32 to vector<1x128xf32>
    %67 = arith.minimumf %65, %66 : vector<1x128xf32>
    %68 = math.exp %67 : vector<1x128xf32>
    %69 = arith.subf %38, %64 : vector<1x128xf32>
    %cst_28 = arith.constant 0.000000e+00 : f32
    %70 = vector.broadcast %cst_28 : f32 to vector<1x128xf32>
    %71 = arith.minimumf %69, %70 : vector<1x128xf32>
    %72 = math.exp %71 : vector<1x128xf32>
    %73 = arith.subf %39, %47 : vector<8x1xf32>
    %74 = math.exp %73 : vector<8x1xf32>
    %75 = arith.subf %40, %54 : vector<8x1xf32>
    %76 = math.exp %75 : vector<8x1xf32>
    %c0_29 = arith.constant 0 : index
    %c0_30 = arith.constant 0 : index
    %77 = vector.load %arg11[%c0_29, %c0_30] : memref<8x1xf32, #tpu.memory_space<vmem>>, vector<8x1xf32>
    %78 = arith.mulf %77, %74 : vector<8x1xf32>
    %79 = vector.broadcast %68 : vector<1x128xf32> to vector<8x128xf32>
    %80 = arith.mulf %19, %79 : vector<8x128xf32>
    %cst_31 = arith.constant dense<0.000000e+00> : vector<8xf32>
    %81 = vector.multi_reduction <add>, %80, %cst_31 [1] : vector<8x128xf32> to vector<8xf32>
    %82 = vector.shape_cast %81 : vector<8xf32> to vector<8x1xf32>
    %83 = arith.addf %78, %82 : vector<8x1xf32>
    %c0_32 = arith.constant 0 : index
    %c0_33 = arith.constant 0 : index
    %84 = vector.load %arg11[%c0_32, %c0_33] : memref<8x1xf32, #tpu.memory_space<vmem>>, vector<8x1xf32>
    tpu.vector_store %arg11[%c0_32, %c0_33], %83 {strides = array<i32>} : memref<8x1xf32, #tpu.memory_space<vmem>>, vector<8x1xf32>,
    %c0_34 = arith.constant 0 : index
    %c0_35 = arith.constant 0 : index
    %85 = vector.load %arg12[%c0_34, %c0_35] : memref<8x1xf32, #tpu.memory_space<vmem>>, vector<8x1xf32>
    %86 = arith.mulf %85, %76 : vector<8x1xf32>
    %87 = vector.broadcast %72 : vector<1x128xf32> to vector<8x128xf32>
    %88 = arith.mulf %19, %87 : vector<8x128xf32>
    %cst_36 = arith.constant dense<0.000000e+00> : vector<8xf32>
    %89 = vector.multi_reduction <add>, %88, %cst_36 [1] : vector<8x128xf32> to vector<8xf32>
    %90 = vector.shape_cast %89 : vector<8xf32> to vector<8x1xf32>
    %91 = arith.addf %86, %90 : vector<8x1xf32>
    %c0_37 = arith.constant 0 : index
    %c0_38 = arith.constant 0 : index
    %92 = vector.load %arg12[%c0_37, %c0_38] : memref<8x1xf32, #tpu.memory_space<vmem>>, vector<8x1xf32>
    tpu.vector_store %arg12[%c0_37, %c0_38], %91 {strides = array<i32>} : memref<8x1xf32, #tpu.memory_space<vmem>>, vector<8x1xf32>,
    %93 = tpu.iota {dimensions = array<i32: 0>} : vector<72x128xi32>
    %c32_i32 = arith.constant 32 : i32
    %94 = vector.broadcast %c32_i32 : i32 to vector<72x128xi32>
    %95 = arith.cmpi slt, %93, %94 : vector<72x128xi32>
    %cst_39 = arith.constant 0.000000e+00 : f32
    %96 = vector.shape_cast %68 : vector<1x128xf32> to vector<1x128xf32>
    %97 = vector.broadcast %96 : vector<1x128xf32> to vector<72x128xf32>
    %98 = vector.broadcast %cst_39 : f32 to vector<72x128xf32>
    %99 = arith.select %95, %97, %98 : vector<72x128xi1>, vector<72x128xf32>
    %c32_i32_40 = arith.constant 32 : i32
    %100 = vector.broadcast %c32_i32_40 : i32 to vector<72x128xi32>
    %101 = arith.cmpi sge, %93, %100 : vector<72x128xi32>
    %c64_i32 = arith.constant 64 : i32
    %102 = vector.broadcast %c64_i32 : i32 to vector<72x128xi32>
    %103 = arith.cmpi slt, %93, %102 : vector<72x128xi32>
    %104 = arith.andi %101, %103 : vector<72x128xi1>
    %cst_41 = arith.constant 0.000000e+00 : f32
    %105 = vector.shape_cast %72 : vector<1x128xf32> to vector<1x128xf32>
    %106 = vector.broadcast %105 : vector<1x128xf32> to vector<72x128xf32>
    %107 = vector.broadcast %cst_41 : f32 to vector<72x128xf32>
    %108 = arith.select %104, %106, %107 : vector<72x128xi1>, vector<72x128xf32>
    %109 = arith.mulf %21, %99 : vector<72x128xf32>
    %110 = arith.mulf %22, %108 : vector<72x128xf32>
    %111 = arith.addf %109, %110 : vector<72x128xf32>
    %cst_42 = arith.constant dense<0.000000e+00> : vector<8x72xf32>
    %112 = tpu.matmul %19, %111, %cst_42 {dimension_numbers = #tpu.dot_dimension_numbers<[1], [1], [0], [0], [0, 0, 1, 0], [], []>} : vector<8x128xf32>, vector<72x128xf32>, vector<8x72xf32> -> vector<8x72xf32>
    %113 = tpu.iota {dimensions = array<i32: 1>} : vector<8x72xi32>
    %c32_i32_43 = arith.constant 32 : i32
    %114 = vector.broadcast %c32_i32_43 : i32 to vector<8x72xi32>
    %115 = arith.cmpi slt, %113, %114 : vector<8x72xi32>
    %116 = vector.shape_cast %74 : vector<8x1xf32> to vector<8x1xf32>
    %117 = vector.broadcast %116 : vector<8x1xf32> to vector<8x72xf32>
    %118 = vector.shape_cast %76 : vector<8x1xf32> to vector<8x1xf32>
    %119 = vector.broadcast %118 : vector<8x1xf32> to vector<8x72xf32>
    %120 = arith.select %115, %117, %119 : vector<8x72xi1>, vector<8x72xf32>
    %c0_44 = arith.constant 0 : index
    %c0_45 = arith.constant 0 : index
    %121 = vector.load %arg13[%c0_44, %c0_45] : memref<8x72xf32, #tpu.memory_space<vmem>>, vector<8x72xf32>
    %122 = arith.mulf %121, %120 : vector<8x72xf32>
    %123 = arith.addf %122, %112 : vector<8x72xf32>
    %c0_46 = arith.constant 0 : index
    %c0_47 = arith.constant 0 : index
    %124 = vector.load %arg13[%c0_46, %c0_47] : memref<8x72xf32, #tpu.memory_space<vmem>>, vector<8x72xf32>
    tpu.vector_store %arg13[%c0_46, %c0_47], %123 {strides = array<i32>} : memref<8x72xf32, #tpu.memory_space<vmem>>, vector<8x72xf32>,
    %c1_i32 = arith.constant 1 : i32
    %125 = arith.cmpi eq, %arg0, %c1_i32 : i32
    %126 = arith.extui %125 : i1 to i32
    %c0_i32_48 = arith.constant 0 : i32
    %127 = arith.cmpi ne, %126, %c0_i32_48 : i32
    scf.if %127 {
      %c0_49 = arith.constant 0 : index
      %c0_50 = arith.constant 0 : index
      %128 = vector.load %arg13[%c0_49, %c0_50] : memref<8x72xf32, #tpu.memory_space<vmem>>, vector<8x72xf32>
      %c0_51 = arith.constant 0 : index
      %c0_52 = arith.constant 0 : index
      %129 = vector.load %arg11[%c0_51, %c0_52] : memref<8x1xf32, #tpu.memory_space<vmem>>, vector<8x1xf32>
      %cst_53 = arith.constant 1.000000e-16 : f32
      %130 = vector.broadcast %cst_53 : f32 to vector<8x1xf32>
      %131 = arith.addf %129, %130 : vector<8x1xf32>
      %cst_54 = arith.constant 1.000000e+00 : f32
      %132 = vector.broadcast %cst_54 : f32 to vector<8x1xf32>
      %133 = arith.divf %132, %131 : vector<8x1xf32>
      %c0_55 = arith.constant 0 : index
      %c0_56 = arith.constant 0 : index
      %134 = vector.load %arg12[%c0_55, %c0_56] : memref<8x1xf32, #tpu.memory_space<vmem>>, vector<8x1xf32>
      %cst_57 = arith.constant 1.000000e-16 : f32
      %135 = vector.broadcast %cst_57 : f32 to vector<8x1xf32>
      %136 = arith.addf %134, %135 : vector<8x1xf32>
      %cst_58 = arith.constant 1.000000e+00 : f32
      %137 = vector.broadcast %cst_58 : f32 to vector<8x1xf32>
      %138 = arith.divf %137, %136 : vector<8x1xf32>
      %139 = vector.extract_strided_slice %128 {offsets = [0, 0], sizes = [8, 32], strides = [1, 1]} : vector<8x72xf32> to vector<8x32xf32>
      %140 = vector.broadcast %133 : vector<8x1xf32> to vector<8x32xf32>
      %141 = arith.mulf %139, %140 : vector<8x32xf32>
      %142 = vector.extract_strided_slice %128 {offsets = [0, 32], sizes = [8, 32], strides = [1, 1]} : vector<8x72xf32> to vector<8x32xf32>
      %143 = vector.broadcast %138 : vector<8x1xf32> to vector<8x32xf32>
      %144 = arith.mulf %142, %143 : vector<8x32xf32>
      %145 = arith.addf %141, %144 : vector<8x32xf32>
      %c0_59 = arith.constant 0 : index
      %c0_60 = arith.constant 0 : index
      %146 = vector.load %arg7[%c0_59, %c0_60] : memref<8x32xf32, #tpu.memory_space<vmem>>, vector<8x32xf32>
      tpu.vector_store %arg7[%c0_59, %c0_60], %145 {strides = array<i32>} : memref<8x32xf32, #tpu.memory_space<vmem>>, vector<8x32xf32>,
    } else {
    }
    return
  }
  func.func @transform_0(%arg0: i32) -> (i32, i32) {
    %c0_i32 = arith.constant 0 : i32
    %c0_i32_0 = arith.constant 0 : i32
    return %c0_i32, %arg0 : i32, i32
  }
  func.func @transform_1(%arg0: i32) -> (i32, i32) {
    %c0_i32 = arith.constant 0 : i32
    %c0_i32_0 = arith.constant 0 : i32
    return %c0_i32, %arg0 : i32, i32
  }
  func.func @transform_2(%arg0: i32) -> (i32, i32) {
    %c0_i32 = arith.constant 0 : i32
    %c0_i32_0 = arith.constant 0 : i32
    return %c0_i32, %arg0 : i32, i32
  }
  func.func @transform_3(%arg0: i32) -> (i32, i32) {
    %c0_i32 = arith.constant 0 : i32
    %c0_i32_0 = arith.constant 0 : i32
    %c0_i32_1 = arith.constant 0 : i32
    return %c0_i32, %c0_i32_0 : i32, i32
  }
  func.func @transform_4(%arg0: i32) -> (i32, i32) {
    %c0_i32 = arith.constant 0 : i32
    %c0_i32_0 = arith.constant 0 : i32
    %c0_i32_1 = arith.constant 0 : i32
    return %c0_i32, %c0_i32_0 : i32, i32
  }
  func.func @transform_5(%arg0: i32) -> (i32, i32) {
    %c0_i32 = arith.constant 0 : i32
    %c0_i32_0 = arith.constant 0 : i32
    %c0_i32_1 = arith.constant 0 : i32
    return %c0_i32, %c0_i32_0 : i32, i32
  }
  func.func @transform_6(%arg0: i32) -> (i32, i32) {
    %c0_i32 = arith.constant 0 : i32
    %c0_i32_0 = arith.constant 0 : i32
    %c0_i32_1 = arith.constant 0 : i32
    return %c0_i32, %c0_i32_0 : i32, i32
  }
}

</mosaic_0001>

<llo_original>
// kernel: tpu_custom_call.1
$region0: #{tpu_custom_call.1}
  #allocation0 [shape = 'u32[]', space=smem, size = 0x4, offset = 0x4, fixed_abs, tag = 'smem constant byte address 0x4 - core index']
  #allocation1 [shape = 'u32[72,128]{1,0:T(1,128)}', space=vmem, size = 0x9000, scoped, tag = 'internal scratch']
  #allocation2 [shape = 'f32[72,16]{1,0:T(8,128)}', space=vmem, size = 0x9000, scoped, tag = 'scratch operand']
  #allocation3 [shape = 'f32[8,1]{1,0:T(8,128)}', space=vmem, size = 0x1000, scoped, tag = 'scratch operand']
  #allocation4 [shape = 'f32[8,1]{1,0:T(8,128)}', space=vmem, size = 0x1000, scoped, tag = 'scratch operand']
  #allocation5 [shape = 'f32[8,1]{1,0:T(8,128)}', space=vmem, size = 0x1000, scoped, tag = 'scratch operand']
  #allocation6 [shape = 'f32[8,1]{1,0:T(8,128)}', space=vmem, size = 0x1000, scoped, tag = 'scratch operand']
  #allocation7 [shape = 'f32[8,72]{1,0:T(8,128)}', space=vmem, size = 0x1000, scoped, tag = 'scratch operand']
  %s0 = inlined_call_operand.vmem [shape: s32[1,256], index: 0, kind: input, shape index: {}]
  %s1 = inlined_call_operand.vmem [shape: s32[1,256], index: 1, kind: input, shape index: {}]
  %s2 = inlined_call_operand.vmem [shape: s32[1,256], index: 2, kind: input, shape index: {}]
  %s3 = inlined_call_operand.vmem [shape: f32[32,16], index: 3, kind: input, shape index: {}]
  %s4 = inlined_call_operand.vmem [shape: f32[64,32], index: 4, kind: input, shape index: {}]
  %s5 = inlined_call_operand.vmem [shape: f32[8,64], index: 5, kind: input, shape index: {}]
  %s6 = inlined_call_operand.hbm [shape: f32[8,32], index: 6, kind: output, shape index: {}]
  %s7 = sld [smem:[#allocation0]]
  $region65: #{tpu_custom_call.1} parent=0
    _
  %s9 = ssub.s32 1, %s7
  %s10 = scalar_select 0, %s9, %s7
  $region1: #{tpu_custom_call.1} parent=0
    #allocation8 [shape = 'u8[4096]{0}', space=vmem, size = 0x1000, scoped, tag = 'output window, operand 0, single buffered']
    #allocation9 [shape = 's32[2]{0}', space=sflag, size = 0x8, scoped, tag = 'scoped memory for tpu_custom_call.1']
    %11 = vsyncpa [#allocation9], 0
    loop: start=0, step=1, limit=4
    $region2: #{tpu_custom_call.1} parent=1 // loop_pre_header
      _
    $region3: #{tpu_custom_call.1} parent=1 // loop_header
      %s13 = sphi 0, %s17
      %p14 = scmp.ge.s32.totalorder %s13, 4
      %s23 = sphi 0, %s25
      %s26 = sphi 0, %s23
      %s27 = sphi 0, %s26
      %s43 = sphi 0, %s27
      %s49 = sphi 0, %s51
      %s52 = sphi 0, %s49
      %s53 = sphi 0, %s52
      %s69 = sphi 0, %s53
      %s75 = sphi 0, %s77
      %s78 = sphi 0, %s75
      %s79 = sphi 0, %s78
      %s95 = sphi 0, %s79
      %s99 = sphi 0, %s99
      %s101 = sphi 0, %s99
      %s102 = sphi 0, %s101
      %s116 = sphi 0, %s102
      %s120 = sphi 0, %s120
      %s122 = sphi 0, %s120
      %s123 = sphi 0, %s122
      %s137 = sphi 0, %s123
      %s141 = sphi 0, %s141
      %s143 = sphi 0, %s141
      %s144 = sphi 0, %s143
      %s158 = sphi 0, %s144
      %s162 = sphi 0, %s162
      %s164 = sphi 0, %s162
      %s165 = sphi 0, %s164
      %s179 = sphi 0, %s165
    $region4: #{tpu_custom_call.1} parent=1 // loop_header_branch
      %16 = sbr.rel (%p14) target = $region8
    $region5: #{tpu_custom_call.1} parent=1 // loop_body
      %s18 = ssub.s32 %s13, 1
      %s19 = ssub.s32 %s13, 2
      %s20 = sadd.s32 %s13, 1
      %s21 = ssub.s32 %s13, %s20
      %p22 = scmp.eq.s32.totalorder %s21, 0
      %s24 = sadd.s32 %s23, 1
      %s25 = scalar_select %p22, %s23, %s24
      %p28 = pneg %p22
      %p29 = scmp.eq.s32.totalorder %s13, 1
      %p30 = por %p28, %p29
      %p31 = scmp.ne.s32.totalorder %s23, %s26
      %p32 = scmp.eq.s32.totalorder %s13, 0
      %p33 = por %p31, %p32
      %p34 = scmp.ne.s32.totalorder %s23, %s26
      %p35 = scmp.eq.s32.totalorder %s18, 1
      %p36 = por %p34, %p35
      %p37 = scmp.ne.s32.totalorder %s26, %s27
      %p38 = scmp.eq.s32.totalorder %s18, 0
      %p39 = por %p37, %p38
      %p40 = scmp.ne.s32.totalorder %s26, %s27
      %p41 = scmp.eq.s32.totalorder %s19, 1
      %p42 = por %p40, %p41
      %p44 = scmp.ne.s32.totalorder %s27, %s43
      %p45 = scmp.eq.s32.totalorder %s19, 0
      %p46 = por %p44, %p45
      %s47 = ssub.s32 %s13, %s20
      %p48 = scmp.eq.s32.totalorder %s47, 0
      %s50 = sadd.s32 %s49, 1
      %s51 = scalar_select %p48, %s49, %s50
      %p54 = pneg %p48
      %p55 = scmp.eq.s32.totalorder %s13, 1
      %p56 = por %p54, %p55
      %p57 = scmp.ne.s32.totalorder %s49, %s52
      %p58 = scmp.eq.s32.totalorder %s13, 0
      %p59 = por %p57, %p58
      %p60 = scmp.ne.s32.totalorder %s49, %s52
      %p61 = scmp.eq.s32.totalorder %s18, 1
      %p62 = por %p60, %p61
      %p63 = scmp.ne.s32.totalorder %s52, %s53
      %p64 = scmp.eq.s32.totalorder %s18, 0
      %p65 = por %p63, %p64
      %p66 = scmp.ne.s32.totalorder %s52, %s53
      %p67 = scmp.eq.s32.totalorder %s19, 1
      %p68 = por %p66, %p67
      %p70 = scmp.ne.s32.totalorder %s53, %s69
      %p71 = scmp.eq.s32.totalorder %s19, 0
      %p72 = por %p70, %p71
      %s73 = ssub.s32 %s13, %s20
      %p74 = scmp.eq.s32.totalorder %s73, 0
      %s76 = sadd.s32 %s75, 1
      %s77 = scalar_select %p74, %s75, %s76
      %p80 = pneg %p74
      %p81 = scmp.eq.s32.totalorder %s13, 1
      %p82 = por %p80, %p81
      %p83 = scmp.ne.s32.totalorder %s75, %s78
      %p84 = scmp.eq.s32.totalorder %s13, 0
      %p85 = por %p83, %p84
      %p86 = scmp.ne.s32.totalorder %s75, %s78
      %p87 = scmp.eq.s32.totalorder %s18, 1
      %p88 = por %p86, %p87
      %p89 = scmp.ne.s32.totalorder %s78, %s79
      %p90 = scmp.eq.s32.totalorder %s18, 0
      %p91 = por %p89, %p90
      %p92 = scmp.ne.s32.totalorder %s78, %s79
      %p93 = scmp.eq.s32.totalorder %s19, 1
      %p94 = por %p92, %p93
      %p96 = scmp.ne.s32.totalorder %s79, %s95
      %p97 = scmp.eq.s32.totalorder %s19, 0
      %p98 = por %p96, %p97
      %s100 = sadd.s32 %s99, 1
      %p103 = scmp.eq.s32.totalorder %s13, 1
      %p104 = scmp.ne.s32.totalorder %s99, %s101
      %p105 = scmp.eq.s32.totalorder %s13, 0
      %p106 = por %p104, %p105
      %p107 = scmp.ne.s32.totalorder %s99, %s101
      %p108 = scmp.eq.s32.totalorder %s18, 1
      %p109 = por %p107, %p108
      %p110 = scmp.ne.s32.totalorder %s101, %s102
      %p111 = scmp.eq.s32.totalorder %s18, 0
      %p112 = por %p110, %p111
      %p113 = scmp.ne.s32.totalorder %s101, %s102
      %p114 = scmp.eq.s32.totalorder %s19, 1
      %p115 = por %p113, %p114
      %p117 = scmp.ne.s32.totalorder %s102, %s116
      %p118 = scmp.eq.s32.totalorder %s19, 0
      %p119 = por %p117, %p118
      %s121 = sadd.s32 %s120, 1
      %p124 = scmp.eq.s32.totalorder %s13, 1
      %p125 = scmp.ne.s32.totalorder %s120, %s122
      %p126 = scmp.eq.s32.totalorder %s13, 0
      %p127 = por %p125, %p126
      %p128 = scmp.ne.s32.totalorder %s120, %s122
      %p129 = scmp.eq.s32.totalorder %s18, 1
      %p130 = por %p128, %p129
      %p131 = scmp.ne.s32.totalorder %s122, %s123
      %p132 = scmp.eq.s32.totalorder %s18, 0
      %p133 = por %p131, %p132
      %p134 = scmp.ne.s32.totalorder %s122, %s123
      %p135 = scmp.eq.s32.totalorder %s19, 1
      %p136 = por %p134, %p135
      %p138 = scmp.ne.s32.totalorder %s123, %s137
      %p139 = scmp.eq.s32.totalorder %s19, 0
      %p140 = por %p138, %p139
      %s142 = sadd.s32 %s141, 1
      %p145 = scmp.eq.s32.totalorder %s13, 1
      %p146 = scmp.ne.s32.totalorder %s141, %s143
      %p147 = scmp.eq.s32.totalorder %s13, 0
      %p148 = por %p146, %p147
      %p149 = scmp.ne.s32.totalorder %s141, %s143
      %p150 = scmp.eq.s32.totalorder %s18, 1
      %p151 = por %p149, %p150
      %p152 = scmp.ne.s32.totalorder %s143, %s144
      %p153 = scmp.eq.s32.totalorder %s18, 0
      %p154 = por %p152, %p153
      %p155 = scmp.ne.s32.totalorder %s143, %s144
      %p156 = scmp.eq.s32.totalorder %s19, 1
      %p157 = por %p155, %p156
      %p159 = scmp.ne.s32.totalorder %s144, %s158
      %p160 = scmp.eq.s32.totalorder %s19, 0
      %p161 = por %p159, %p160
      %s163 = sadd.s32 %s162, 1
      %p166 = scmp.eq.s32.totalorder %s13, 1
      %p167 = scmp.ne.s32.totalorder %s162, %s164
      %p168 = scmp.eq.s32.totalorder %s13, 0
      %p169 = por %p167, %p168
      %p170 = scmp.ne.s32.totalorder %s162, %s164
      %p171 = scmp.eq.s32.totalorder %s18, 1
      %p172 = por %p170, %p171
      %p173 = scmp.ne.s32.totalorder %s164, %s165
      %p174 = scmp.eq.s32.totalorder %s18, 0
      %p175 = por %p173, %p174
      %p176 = scmp.ne.s32.totalorder %s164, %s165
      %p177 = scmp.eq.s32.totalorder %s19, 1
      %p178 = por %p176, %p177
      %p180 = scmp.ne.s32.totalorder %s165, %s179
      %p181 = scmp.eq.s32.totalorder %s19, 0
      %p182 = por %p180, %p181
      %p183 = scmp.le.s32.totalorder 1, %s13
      %p184 = scmp.lt.s32.totalorder %s13, 3
      %p185 = pnand %p183, %p184
      %p186 = pneg %p185
      // Predicated region
      $region9: #{tpu_custom_call.1} parent=5 // pred_check
        _
      $region10: #{tpu_custom_call.1} parent=5 // pred_check_branch
        %188 = sbr.rel (%p185) target = $region12
      $region11: #{tpu_custom_call.1} parent=5 // pred_region
        %s189 = ssub.s32 %s13, 1
        // Predicated region
        $region13: #{tpu_custom_call.1} parent=11 // pred_check
          %p190 = pneg %p112
        $region14: #{tpu_custom_call.1} parent=11 // pred_check_branch
          %192 = sbr.rel (%p190) target = $region16
        $region15: #{tpu_custom_call.1} parent=11 // pred_region
          _
        $region16: #{tpu_custom_call.1} parent=11 // pred_fallthru
          _
        // Predicated region
        $region17: #{tpu_custom_call.1} parent=11 // pred_check
          %p193 = pneg %p133
        $region18: #{tpu_custom_call.1} parent=11 // pred_check_branch
          %195 = sbr.rel (%p193) target = $region20
        $region19: #{tpu_custom_call.1} parent=11 // pred_region
          _
        $region20: #{tpu_custom_call.1} parent=11 // pred_fallthru
          _
        // Predicated region
        $region21: #{tpu_custom_call.1} parent=11 // pred_check
          %p196 = pneg %p154
        $region22: #{tpu_custom_call.1} parent=11 // pred_check_branch
          %198 = sbr.rel (%p196) target = $region24
        $region23: #{tpu_custom_call.1} parent=11 // pred_region
          _
        $region24: #{tpu_custom_call.1} parent=11 // pred_fallthru
          _
      $region12: #{tpu_custom_call.1} parent=5 // pred_fallthru
        _
      %p199 = scmp.lt.s32.totalorder %s13, 2
      // Predicated region
      $region25: #{tpu_custom_call.1} parent=5 // pred_check
        %p200 = pneg %p199
      $region26: #{tpu_custom_call.1} parent=5 // pred_check_branch
        %202 = sbr.rel (%p200) target = $region28
      $region27: #{tpu_custom_call.1} parent=5 // pred_region
        // Predicated region
        $region29: #{tpu_custom_call.1} parent=27 // pred_check
          %p203 = pneg %p33
        $region30: #{tpu_custom_call.1} parent=27 // pred_check_branch
          %205 = sbr.rel (%p203) target = $region32
        $region31: #{tpu_custom_call.1} parent=27 // pred_region
          %p206 = scmp.lt.s32.totalorder %s13, 1
          %s207 = scalar_select %p206, %s13, 1
          %s208 = scalar_lea.vmem %s0, %s207
        $region32: #{tpu_custom_call.1} parent=27 // pred_fallthru
          _
        // Predicated region
        $region33: #{tpu_custom_call.1} parent=27 // pred_check
          %p209 = pneg %p59
        $region34: #{tpu_custom_call.1} parent=27 // pred_check_branch
          %211 = sbr.rel (%p209) target = $region36
        $region35: #{tpu_custom_call.1} parent=27 // pred_region
          %p212 = scmp.lt.s32.totalorder %s13, 1
          %s213 = scalar_select %p212, %s13, 1
          %s214 = scalar_lea.vmem %s1, %s213
        $region36: #{tpu_custom_call.1} parent=27 // pred_fallthru
          _
        // Predicated region
        $region37: #{tpu_custom_call.1} parent=27 // pred_check
          %p215 = pneg %p85
        $region38: #{tpu_custom_call.1} parent=27 // pred_check_branch
          %217 = sbr.rel (%p215) target = $region40
        $region39: #{tpu_custom_call.1} parent=27 // pred_region
          %p218 = scmp.lt.s32.totalorder %s13, 1
          %s219 = scalar_select %p218, %s13, 1
          %s220 = scalar_lea.vmem %s2, %s219
        $region40: #{tpu_custom_call.1} parent=27 // pred_fallthru
          _
      $region28: #{tpu_custom_call.1} parent=5 // pred_fallthru
        _
      %p221 = scmp.le.s32.totalorder 1, %s13
      %p222 = scmp.lt.s32.totalorder %s13, 3
      %p223 = pnand %p221, %p222
      %p224 = pneg %p223
      // Predicated region
      $region41: #{tpu_custom_call.1} parent=5 // pred_check
        _
      $region42: #{tpu_custom_call.1} parent=5 // pred_check_branch
        %226 = sbr.rel (%p223) target = $region44
      $region43: #{tpu_custom_call.1} parent=5 // pred_region
        %s227 = ssub.s32 %s13, 1
        %p228 = scmp.lt.s32.totalorder %s18, 1
        %s229 = scalar_select %p228, %s18, 1
        %s230 = scalar_lea.vmem %s0, %s229
        %p231 = pneg %p39
        %p232 = pneg %p36
        %p233 = scmp.lt.s32.totalorder %s18, 1
        %s234 = scalar_select %p233, %s18, 1
        %s235 = scalar_lea.vmem %s1, %s234
        %p236 = pneg %p65
        %p237 = pneg %p62
        %p238 = scmp.lt.s32.totalorder %s18, 1
        %s239 = scalar_select %p238, %s18, 1
        %s240 = scalar_lea.vmem %s2, %s239
        %p241 = pneg %p91
        %p242 = pneg %p88
        %p243 = pneg %p112
        %p244 = pneg %p109
        %p245 = pneg %p133
        %p246 = pneg %p130
        %p247 = pneg %p154
        %p248 = pneg %p151
        %p249 = pneg %p175
        %p250 = pneg %p172
        %p251 = scmp.lt.s32.totalorder %s18, 1
        %s252 = scalar_select %p251, %s18, 1
        %s253 = scalar_lea.vmem %s0, %s252
        %p254 = scmp.lt.s32.totalorder %s18, 1
        %s255 = scalar_select %p254, %s18, 1
        %s256 = scalar_lea.vmem %s1, %s255
        %p257 = scmp.lt.s32.totalorder %s18, 1
        %s258 = scalar_select %p257, %s18, 1
        %s259 = scalar_lea.vmem %s2, %s258
        %p260 = scmp.eq.s32.totalorder %s18, 0
        // Predicated region
        $region45: #{tpu_custom_call.1} parent=43 // pred_check
          %p261 = pneg %p260
        $region46: #{tpu_custom_call.1} parent=43 // pred_check_branch
          %263 = sbr.rel (%p261) target = $region48
        $region47: #{tpu_custom_call.1} parent=43 // pred_region
          %v264 = vld [vmem:[%s4] sm:$0xff]
          %v265 = vld [vmem:[%s4 + $0x8] sm:$0xff]
          %v266 = vld [vmem:[%s4 + $0x10] sm:$0xff]
          %v267 = vld [vmem:[%s4 + $0x18] sm:$0xff]
          %v268 = vld [vmem:[%s4 + $0x20] sm:$0xff]
          %v269 = vld [vmem:[%s4 + $0x28] sm:$0xff]
          %v270 = vld [vmem:[%s4 + $0x30] sm:$0xff]
          %v271 = vld [vmem:[%s4 + $0x38] sm:$0xff]
          %v272 = vld [vmem:[%s3] sm:$0xff]
          %v273 = vld [vmem:[%s3 + $0x8] sm:$0xff]
          %v274 = vld [vmem:[%s3 + $0x10] sm:$0xff]
          %v275 = vld [vmem:[%s3 + $0x18] sm:$0xff]
          %vm276 = vcmask 261120
          %v278 = vsel %vm276, %v264, 0
          %v281 = vsel %vm276, %v265, 0
          %v284 = vsel %vm276, %v266, 0
          %v287 = vsel %vm276, %v267, 0
          %v290 = vsel %vm276, %v268, 0
          %v293 = vsel %vm276, %v269, 0
          %v296 = vsel %vm276, %v270, 0
          %v299 = vsel %vm276, %v271, 0
          %301 = vmatpush.msra.mxu0 0.0
          %302 = vmatpush.msra.mxu0 0.0
          %303 = vmatpush.msra.mxu0 0.0
          %304 = vmatpush.msra.mxu0 0.0
          %305 = vmatpush.msra.mxu0 0.0
          %306 = vmatpush.msra.mxu0 0.0
          %307 = vmatpush.msra.mxu0 0.0
          %308 = vmatpush.msra.mxu0 0.0
          %309 = vmatpush.msra.mxu0 0.0
          %310 = vmatpush.msra.mxu0 0.0
          %311 = vmatpush.msra.mxu0 0.0
          %312 = vmatpush.msra.mxu0 0.0
          %313 = vmatpush.msra.mxu0 %v275
          %314 = vmatpush.msra.mxu0 %v274
          %315 = vmatpush.msra.mxu0 %v273
          %316 = vmatpush.msra.mxu0 %v272
          %317 = vmatmul.f32.gmra.mxu0 %v278
          %v318 = vpop.f32.mrf.mxu0
          %v319 = vadd.f32 0.0, %v318
          %320 = vmatmul.f32.gmra.mxu0 %v281
          %v321 = vpop.f32.mrf.mxu0
          %v322 = vadd.f32 0.0, %v321
          %323 = vmatmul.f32.gmra.mxu0 %v284
          %v324 = vpop.f32.mrf.mxu0
          %v325 = vadd.f32 0.0, %v324
          %326 = vmatmul.f32.gmra.mxu0 %v287
          %v327 = vpop.f32.mrf.mxu0
          %v328 = vadd.f32 0.0, %v327
          %329 = vmatmul.f32.gmra.mxu0 %v290
          %v330 = vpop.f32.mrf.mxu0
          %v331 = vadd.f32 0.0, %v330
          %332 = vmatmul.f32.gmra.mxu0 %v293
          %v333 = vpop.f32.mrf.mxu0
          %v334 = vadd.f32 0.0, %v333
          %335 = vmatmul.f32.gmra.mxu0 %v296
          %v336 = vpop.f32.mrf.mxu0
          %v337 = vadd.f32 0.0, %v336
          %338 = vmatmul.f32.gmra.mxu0 %v299
          %v339 = vpop.f32.mrf.mxu0
          %v340 = vadd.f32 0.0, %v339
          %341 = vdwg.mxu0
          %v342 = vld [vmem:[%s5] sm:$0xff]
          %vm343 = vcmask 523264
          %v345 = vsel %vm343, %v342, 0
          %347 = vmatpush.msra.mxu0 0.0
          %348 = vmatpush.msra.mxu0 0.0
          %349 = vmatpush.msra.mxu0 0.0
          %350 = vmatpush.msra.mxu0 0.0
          %351 = vmatpush.msra.mxu0 0.0
          %352 = vmatpush.msra.mxu0 0.0
          %353 = vmatpush.msra.mxu0 0.0
          %354 = vmatpush.msra.mxu0 0.0
          %355 = vmatpush.msra.mxu0 %v340
          %356 = vmatpush.msra.mxu0 %v337
          %357 = vmatpush.msra.mxu0 %v334
          %358 = vmatpush.msra.mxu0 %v331
          %359 = vmatpush.msra.mxu0 %v328
          %360 = vmatpush.msra.mxu0 %v325
          %361 = vmatpush.msra.mxu0 %v322
          %362 = vmatpush.msra.mxu0 %v319
          %363 = vmatmul.f32.gmra.mxu0 %v345
          %v364 = vpop.f32.mrf.mxu0
          %v365 = vadd.f32 0.0, %v364
          %366 = vdwg.mxu0
          %vm367 = vcmask 130048
          %368 = vst.msk [vmem:[#allocation2] sm:$0xff] %vm367, %v319
          %369 = vst.msk [vmem:[#allocation2 + $0x8] sm:$0xff] %vm367, %v322
          %370 = vst.msk [vmem:[#allocation2 + $0x10] sm:$0xff] %vm367, %v325
          %371 = vst.msk [vmem:[#allocation2 + $0x18] sm:$0xff] %vm367, %v328
          %372 = vst.msk [vmem:[#allocation2 + $0x20] sm:$0xff] %vm367, %v331
          %373 = vst.msk [vmem:[#allocation2 + $0x28] sm:$0xff] %vm367, %v334
          %374 = vst.msk [vmem:[#allocation2 + $0x30] sm:$0xff] %vm367, %v337
          %375 = vst.msk [vmem:[#allocation2 + $0x38] sm:$0xff] %vm367, %v340
          %376 = vst.msk [vmem:[#allocation2 + $0x40] sm:$0xff] %vm367, %v365
          %vm377 = vcmask 7168
          %378 = vst.msk [vmem:[#allocation3] sm:$0xff] %vm377, -1e+30
          %379 = vst.msk [vmem:[#allocation4] sm:$0xff] %vm377, -1e+30
          %380 = vst.msk [vmem:[#allocation5] sm:$0xff] %vm377, 0.0
          %381 = vst.msk [vmem:[#allocation6] sm:$0xff] %vm377, 0.0
          %vm382 = vcmask 588800
          %383 = vst.msk [vmem:[#allocation7] sm:$0xff] %vm382, 0.0
        $region48: #{tpu_custom_call.1} parent=43 // pred_fallthru
          _
        %v384 = vld [vmem:[%s253] sm:$0x1]
        %v385 = vld [vmem:[%s256] sm:$0x1]
        %v386 = vld [vmem:[%s259] sm:$0x1]
        %v387 = vlaneseq
        %v388 = vshrl.u32 %v387, 7
        %v389 = vadd.s32 %v388, 8
        %v390 = vperm.slane %v384, 0
        %vm391 = vcmp.eq.s32.totalorder %v388, %v390
        %vm392 = vcmp.eq.s32.totalorder %v389, %v390
        %v393 = vsel %vm391, 1, 0
        %v394 = vsel %vm392, 1, 0
        %v395 = vcvt.s32.f32 %v393
        %v396 = vcvt.s32.f32 %v394
        %v397 = vperm.slane %v385, 0
        %vm398 = vcmp.eq.s32.totalorder %v388, %v397
        %vm399 = vcmp.eq.s32.totalorder %v389, %v397
        %v400 = vsel %vm398, 1, 0
        %v401 = vsel %vm399, 1, 0
        %v402 = vcvt.s32.f32 %v400
        %v403 = vcvt.s32.f32 %v401
        %v404 = vperm.slane %v386, 0
        %vm405 = vcmp.eq.s32.totalorder %v388, %v404
        %v406 = vsel %vm405, 1, 0
        %v407 = vcvt.s32.f32 %v406
        %v408 = vld [vmem:[#allocation2] sm:$0xff]
        %v409 = vld [vmem:[#allocation2 + $0x8] sm:$0xff]
        %v410 = vld [vmem:[#allocation2 + $0x10] sm:$0xff]
        %v411 = vld [vmem:[#allocation2 + $0x18] sm:$0xff]
        %v412 = vld [vmem:[#allocation2 + $0x20] sm:$0xff]
        %v413 = vld [vmem:[#allocation2 + $0x28] sm:$0xff]
        %v414 = vld [vmem:[#allocation2 + $0x30] sm:$0xff]
        %v415 = vld [vmem:[#allocation2 + $0x38] sm:$0xff]
        %v416 = vld [vmem:[#allocation2 + $0x40] sm:$0xff]
        %vm417 = vcmask 130048
        %v419 = vsel %vm417, %v408, 0
        %v422 = vsel %vm417, %v409, 0
        %v425 = vsel %vm417, %v410, 0
        %v428 = vsel %vm417, %v411, 0
        %v431 = vsel %vm417, %v412, 0
        %v434 = vsel %vm417, %v413, 0
        %v437 = vsel %vm417, %v414, 0
        %v440 = vsel %vm417, %v415, 0
        %v443 = vsel %vm417, %v416, 0
        %445 = vmatpush.msra.mxu0 0.0
        %446 = vmatpush.msra.mxu0 0.0
        %447 = vmatpush.msra.mxu0 0.0
        %448 = vmatpush.msra.mxu0 0.0
        %449 = vmatpush.msra.mxu0 0.0
        %450 = vmatpush.msra.mxu0 0.0
        %451 = vmatpush.msra.mxu0 0.0
        %452 = vmatpush.msra.mxu0 0.0
        %453 = vmatpush.msra.mxu0 0.0
        %454 = vmatpush.msra.mxu0 0.0
        %455 = vmatpush.msra.mxu0 0.0
        %456 = vmatpush.msra.mxu0 0.0
        %457 = vmatpush.msra.mxu0 0.0
        %458 = vmatpush.msra.mxu0 0.0
        %459 = vmatpush.msra.mxu0 %v396
        %460 = vmatpush.msra.mxu0 %v395
        %461 = vmatmul.f32.gmra.mxu0 %v419
        %v462 = vpop.f32.mrf.mxu0
        %v463 = vadd.f32 0.0, %v462
        %464 = vmatmul.f32.gmra.mxu0 %v422
        %v465 = vpop.f32.mrf.mxu0
        %v466 = vadd.f32 0.0, %v465
        %467 = vmatmul.f32.gmra.mxu0 %v425
        %v468 = vpop.f32.mrf.mxu0
        %v469 = vadd.f32 0.0, %v468
        %470 = vmatmul.f32.gmra.mxu0 %v428
        %v471 = vpop.f32.mrf.mxu0
        %v472 = vadd.f32 0.0, %v471
        %473 = vmatmul.f32.gmra.mxu0 %v431
        %v474 = vpop.f32.mrf.mxu0
        %v475 = vadd.f32 0.0, %v474
        %476 = vmatmul.f32.gmra.mxu0 %v434
        %v477 = vpop.f32.mrf.mxu0
        %v478 = vadd.f32 0.0, %v477
        %479 = vmatmul.f32.gmra.mxu0 %v437
        %v480 = vpop.f32.mrf.mxu0
        %v481 = vadd.f32 0.0, %v480
        %482 = vmatmul.f32.gmra.mxu0 %v440
        %v483 = vpop.f32.mrf.mxu0
        %v484 = vadd.f32 0.0, %v483
        %485 = vmatmul.f32.gmra.mxu0 %v443
        %v486 = vpop.f32.mrf.mxu0
        %v487 = vadd.f32 0.0, %v486
        %488 = vdwg.mxu0
        %489 = vmatpush.msra.mxu0 0.0
        %490 = vmatpush.msra.mxu0 0.0
        %491 = vmatpush.msra.mxu0 0.0
        %492 = vmatpush.msra.mxu0 0.0
        %493 = vmatpush.msra.mxu0 0.0
        %494 = vmatpush.msra.mxu0 0.0
        %495 = vmatpush.msra.mxu0 0.0
        %496 = vmatpush.msra.mxu0 0.0
        %497 = vmatpush.msra.mxu0 0.0
        %498 = vmatpush.msra.mxu0 0.0
        %499 = vmatpush.msra.mxu0 0.0
        %500 = vmatpush.msra.mxu0 0.0
        %501 = vmatpush.msra.mxu0 0.0
        %502 = vmatpush.msra.mxu0 0.0
        %503 = vmatpush.msra.mxu0 %v403
        %504 = vmatpush.msra.mxu0 %v402
        %505 = vmatmul.f32.gmra.mxu0 %v419
        %v506 = vpop.f32.mrf.mxu0
        %v507 = vadd.f32 0.0, %v506
        %508 = vmatmul.f32.gmra.mxu0 %v422
        %v509 = vpop.f32.mrf.mxu0
        %v510 = vadd.f32 0.0, %v509
        %511 = vmatmul.f32.gmra.mxu0 %v425
        %v512 = vpop.f32.mrf.mxu0
        %v513 = vadd.f32 0.0, %v512
        %514 = vmatmul.f32.gmra.mxu0 %v428
        %v515 = vpop.f32.mrf.mxu0
        %v516 = vadd.f32 0.0, %v515
        %517 = vmatmul.f32.gmra.mxu0 %v431
        %v518 = vpop.f32.mrf.mxu0
        %v519 = vadd.f32 0.0, %v518
        %520 = vmatmul.f32.gmra.mxu0 %v434
        %v521 = vpop.f32.mrf.mxu0
        %v522 = vadd.f32 0.0, %v521
        %523 = vmatmul.f32.gmra.mxu0 %v437
        %v524 = vpop.f32.mrf.mxu0
        %v525 = vadd.f32 0.0, %v524
        %526 = vmatmul.f32.gmra.mxu0 %v440
        %v527 = vpop.f32.mrf.mxu0
        %v528 = vadd.f32 0.0, %v527
        %529 = vmatmul.f32.gmra.mxu0 %v443
        %v530 = vpop.f32.mrf.mxu0
        %v531 = vadd.f32 0.0, %v530
        %532 = vdwg.mxu0
        %v534 = vrot.slane %v531, 1
        %v536 = vadd.f32 %v487, %v534
        %vm537 = vcmp.gt.f32.partialorder %v536, 0.0
        %v538 = vmul.f32 %v536, 0.01
        %v539 = vsel %vm537, %v536, %v538
        %v540 = vld [vmem:[#allocation3] sm:$0xff]
        %v541 = vld [vmem:[#allocation4] sm:$0xff]
        %v542 = vperm.slane %v539, 0
        %v543 = vsel %vm405, %v542, -1e+30
        %544 = vmax.xlane.f32.xlu0 %v543
        %v545 = vpop.xlane.xlu0 %544
        %v546 = vmax.f32 %v540, %v545
        %v547 = vperm.slane %v539, 2
        %v548 = vsel %vm405, %v547, -1e+30
        %549 = vmax.xlane.f32.xlu0 %v548
        %v550 = vpop.xlane.xlu0 %549
        %v551 = vmax.f32 %v541, %v550
        %vm552 = vcmask 7168
        %553 = vst.msk [vmem:[#allocation3] sm:$0xff] %vm552, %v546
        %554 = vst.msk [vmem:[#allocation4] sm:$0xff] %vm552, %v551
        %556 = vset.pattern.permute.xlu0 0
        %557 = vperm.xlu0 %556, %v546
        %v558 = vpop.permute.xlu0 %557
        %v560 = vmul.f32 %v407, %v558
        %v561 = vrot.slane %v560, 4
        %v562 = vadd.f32 %v560, %v561
        %v563 = vrot.slane %v562, 2
        %v564 = vadd.f32 %v562, %v563
        %v565 = vrot.slane %v564, 1
        %v566 = vadd.f32 %v564, %v565
        %568 = vset.pattern.permute.xlu0 0
        %569 = vperm.xlu0 %568, %v551
        %v570 = vpop.permute.xlu0 %569
        %v572 = vmul.f32 %v407, %v570
        %v573 = vrot.slane %v572, 4
        %v574 = vadd.f32 %v572, %v573
        %v575 = vrot.slane %v574, 2
        %v576 = vadd.f32 %v574, %v575
        %v577 = vrot.slane %v576, 1
        %v578 = vadd.f32 %v576, %v577
        %v579 = vsub.f32 %v539, %v566
        %v580 = vmin.f32 %v579, 0.0
        %v581 = vmul.f32 %v580, 1.442695
        %v582 = vpow.pop %v581
        %v583 = vsub.f32 %v539, %v578
        %v584 = vmin.f32 %v583, 0.0
        %v585 = vmul.f32 %v584, 1.442695
        %v586 = vpow.pop %v585
        %v587 = vsub.f32 %v540, %v546
        %v588 = vmul.f32 %v587, 1.442695
        %v589 = vpow.pop %v588
        %v590 = vsub.f32 %v541, %v551
        %v591 = vmul.f32 %v590, 1.442695
        %v592 = vpow.pop %v591
        %v593 = vld [vmem:[#allocation5] sm:$0xff]
        %v594 = vmul.f32 %v593, %v589
        %v595 = vperm.slane %v582, 0
        %v596 = vmul.f32 %v407, %v595
        %597 = vadd.xlane.f32.xlu0 %v596
        %v598 = vpop.xlane.xlu0 %597
        %v599 = vadd.f32 %v594, %v598
        %600 = vst.msk [vmem:[#allocation5] sm:$0xff] %vm552, %v599
        %v601 = vld [vmem:[#allocation6] sm:$0xff]
        %v602 = vmul.f32 %v601, %v592
        %v603 = vperm.slane %v586, 2
        %v604 = vmul.f32 %v407, %v603
        %605 = vadd.xlane.f32.xlu0 %v604
        %v606 = vpop.xlane.xlu0 %605
        %v607 = vadd.f32 %v602, %v606
        %608 = vst.msk [vmem:[#allocation6] sm:$0xff] %vm552, %v607
        %v609 = vadd.s32 %v388, 16
        %v610 = vadd.s32 %v388, 24
        %v611 = vadd.s32 %v388, 32
        %v612 = vadd.s32 %v388, 40
        %v613 = vadd.s32 %v388, 48
        %v614 = vadd.s32 %v388, 56
        %v615 = vadd.s32 %v388, 64
        %vm616 = vcmp.lt.s32.totalorder %v388, 32
        %vm617 = vcmp.lt.s32.totalorder %v389, 32
        %vm618 = vcmp.lt.s32.totalorder %v609, 32
        %vm619 = vcmp.lt.s32.totalorder %v610, 32
        %vm620 = vcmp.lt.s32.totalorder %v611, 32
        %vm621 = vcmp.lt.s32.totalorder %v612, 32
        %vm622 = vcmp.lt.s32.totalorder %v613, 32
        %vm623 = vcmp.lt.s32.totalorder %v614, 32
        %vm624 = vcmp.lt.s32.totalorder %v615, 32
        %v625 = vsel %vm616, %v595, 0.0
        %v626 = vsel %vm617, %v595, 0.0
        %v627 = vsel %vm618, %v595, 0.0
        %v628 = vsel %vm619, %v595, 0.0
        %v629 = vsel %vm620, %v595, 0.0
        %v630 = vsel %vm621, %v595, 0.0
        %v631 = vsel %vm622, %v595, 0.0
        %v632 = vsel %vm623, %v595, 0.0
        %v633 = vsel %vm624, %v595, 0.0
        %vm634 = vcmp.ge.s32.totalorder %v388, 32
        %vm635 = vcmp.ge.s32.totalorder %v389, 32
        %vm636 = vcmp.ge.s32.totalorder %v609, 32
        %vm637 = vcmp.ge.s32.totalorder %v610, 32
        %vm638 = vcmp.ge.s32.totalorder %v611, 32
        %vm639 = vcmp.ge.s32.totalorder %v612, 32
        %vm640 = vcmp.ge.s32.totalorder %v613, 32
        %vm641 = vcmp.ge.s32.totalorder %v614, 32
        %vm642 = vcmp.ge.s32.totalorder %v615, 32
        %vm643 = vcmp.lt.s32.totalorder %v388, 64
        %vm644 = vcmp.lt.s32.totalorder %v389, 64
        %vm645 = vcmp.lt.s32.totalorder %v609, 64
        %vm646 = vcmp.lt.s32.totalorder %v610, 64
        %vm647 = vcmp.lt.s32.totalorder %v611, 64
        %vm648 = vcmp.lt.s32.totalorder %v612, 64
        %vm649 = vcmp.lt.s32.totalorder %v613, 64
        %vm650 = vcmp.lt.s32.totalorder %v614, 64
        %vm651 = vcmp.lt.s32.totalorder %v615, 64
        %vm652 = vmand %vm634, %vm643
        %vm653 = vmand %vm635, %vm644
        %vm654 = vmand %vm636, %vm645
        %vm655 = vmand %vm637, %vm646
        %vm656 = vmand %vm638, %vm647
        %vm657 = vmand %vm639, %vm648
        %vm658 = vmand %vm640, %vm649
        %vm659 = vmand %vm641, %vm650
        %vm660 = vmand %vm642, %vm651
        %v661 = vsel %vm652, %v603, 0.0
        %v662 = vsel %vm653, %v603, 0.0
        %v663 = vsel %vm654, %v603, 0.0
        %v664 = vsel %vm655, %v603, 0.0
        %v665 = vsel %vm656, %v603, 0.0
        %v666 = vsel %vm657, %v603, 0.0
        %v667 = vsel %vm658, %v603, 0.0
        %v668 = vsel %vm659, %v603, 0.0
        %v669 = vsel %vm660, %v603, 0.0
        %v670 = vmul.f32 %v463, %v625
        %v671 = vmul.f32 %v466, %v626
        %v672 = vmul.f32 %v469, %v627
        %v673 = vmul.f32 %v472, %v628
        %v674 = vmul.f32 %v475, %v629
        %v675 = vmul.f32 %v478, %v630
        %v676 = vmul.f32 %v481, %v631
        %v677 = vmul.f32 %v484, %v632
        %v678 = vmul.f32 %v487, %v633
        %v679 = vmul.f32 %v507, %v661
        %v680 = vmul.f32 %v510, %v662
        %v681 = vmul.f32 %v513, %v663
        %v682 = vmul.f32 %v516, %v664
        %v683 = vmul.f32 %v519, %v665
        %v684 = vmul.f32 %v522, %v666
        %v685 = vmul.f32 %v525, %v667
        %v686 = vmul.f32 %v528, %v668
        %v687 = vmul.f32 %v531, %v669
        %v688 = vadd.f32 %v670, %v679
        %v689 = vadd.f32 %v671, %v680
        %v690 = vadd.f32 %v672, %v681
        %v691 = vadd.f32 %v673, %v682
        %v692 = vadd.f32 %v674, %v683
        %v693 = vadd.f32 %v675, %v684
        %v694 = vadd.f32 %v676, %v685
        %v695 = vadd.f32 %v677, %v686
        %v696 = vadd.f32 %v678, %v687
        %697 = vmatpush.xpose.msra.mxu0 0.0
        %698 = vmatpush.xpose.msra.mxu0 0.0
        %699 = vmatpush.xpose.msra.mxu0 0.0
        %700 = vmatpush.xpose.msra.mxu0 0.0
        %701 = vmatpush.xpose.msra.mxu0 0.0
        %702 = vmatpush.xpose.msra.mxu0 0.0
        %703 = vmatpush.xpose.msra.mxu0 0.0
        %704 = vmatpush.xpose.msra.mxu0 %v696
        %705 = vmatpush.xpose.msra.mxu0 %v695
        %706 = vmatpush.xpose.msra.mxu0 %v694
        %707 = vmatpush.xpose.msra.mxu0 %v693
        %708 = vmatpush.xpose.msra.mxu0 %v692
        %709 = vmatpush.xpose.msra.mxu0 %v691
        %710 = vmatpush.xpose.msra.mxu0 %v690
        %711 = vmatpush.xpose.msra.mxu0 %v689
        %712 = vmatpush.xpose.msra.mxu0 %v688
        %713 = vmatmul.f32.gmra.mxu0 %v407
        %v714 = vpop.f32.mrf.mxu0
        %v715 = vadd.f32 0.0, %v714
        %716 = vdwg.mxu0
        %v717 = vlaneseq
        %v718 = vand.u32 %v717, 127
        %vm719 = vcmp.lt.s32.totalorder %v718, 32
        %721 = vset.pattern.permute.xlu0 0
        %722 = vperm.xlu0 %721, %v589
        %v723 = vpop.permute.xlu0 %722
        %726 = vset.pattern.permute.xlu0 0
        %727 = vperm.xlu0 %726, %v592
        %v728 = vpop.permute.xlu0 %727
        %v730 = vsel %vm719, %v723, %v728
        %v731 = vld [vmem:[#allocation7] sm:$0xff]
        %v732 = vmul.f32 %v731, %v730
        %v733 = vadd.f32 %v732, %v715
        %vm734 = vcmask 588800
        %735 = vst.msk [vmem:[#allocation7] sm:$0xff] %vm734, %v733
        %p736 = scmp.eq.s32.totalorder %s18, 1
        // Predicated region
        $region49: #{tpu_custom_call.1} parent=43 // pred_check
          %p737 = pneg %p736
        $region50: #{tpu_custom_call.1} parent=43 // pred_check_branch
          %739 = sbr.rel (%p737) target = $region52
        $region51: #{tpu_custom_call.1} parent=43 // pred_region
          %v740 = vld [vmem:[#allocation7] sm:$0xff]
          %v741 = vld [vmem:[#allocation5] sm:$0xff]
          %v742 = vadd.f32 %v741, 1e-16
          %v743 = vrcp.pop %v742
          %v744 = vmul.f32 %v742, %v743
          %v745 = vsub.f32 1.0, %v744
          %v746 = vmul.f32 %v743, %v745
          %v747 = vadd.f32 %v743, %v746
          %vm748 = vweird.f32 %v742
          %vm749 = vweird.f32 %v743
          %vm750 = vmor %vm748, %vm749
          %v751 = vsel %vm750, %v743, %v747
          %v752 = vand.u32 2147483647, %v742
          %vm753 = vcmp.eq.f32.partialorder %v752, 8.507059e+37
          %v754 = vand.u32 %v742, 2147483648
          %v755 = vor.u32 1.1754944e-38, %v754
          %v756 = vsel %vm753, %v755, %v751
          %v757 = vmul.f32 1.0, %v756
          %v758 = vld [vmem:[#allocation6] sm:$0xff]
          %v759 = vadd.f32 %v758, 1e-16
          %v760 = vrcp.pop %v759
          %v761 = vmul.f32 %v759, %v760
          %v762 = vsub.f32 1.0, %v761
          %v763 = vmul.f32 %v760, %v762
          %v764 = vadd.f32 %v760, %v763
          %vm765 = vweird.f32 %v759
          %vm766 = vweird.f32 %v760
          %vm767 = vmor %vm765, %vm766
          %v768 = vsel %vm767, %v760, %v764
          %v769 = vand.u32 2147483647, %v759
          %vm770 = vcmp.eq.f32.partialorder %v769, 8.507059e+37
          %v771 = vand.u32 %v759, 2147483648
          %v772 = vor.u32 1.1754944e-38, %v771
          %v773 = vsel %vm770, %v772, %v768
          %v774 = vmul.f32 1.0, %v773
          %776 = vset.pattern.permute.xlu0 0
          %777 = vperm.xlu0 %776, %v757
          %v778 = vpop.permute.xlu0 %777
          %v780 = vmul.f32 %v740, %v778
          %782 = vset.pattern.permute.xlu0 0
          %783 = vperm.xlu0 %782, %v774
          %v784 = vpop.permute.xlu0 %783
          %v786 = vmul.f32 %v740, %v784
          %788 = vrot.lane.b32.xlu0 %v786, 96
          %v789 = vpop.permute.xlu0 %788
          %v791 = vadd.f32 %v780, %v789
          %vm792 = vcmask 261120
          %793 = vst.msk [vmem:[#allocation8] sm:$0xff] %vm792, %v791
        $region52: #{tpu_custom_call.1} parent=43 // pred_fallthru
          _
        // Predicated region
        $region53: #{tpu_custom_call.1} parent=43 // pred_check
          %p794 = pneg %p172
        $region54: #{tpu_custom_call.1} parent=43 // pred_check_branch
          %796 = sbr.rel (%p794) target = $region56
        $region55: #{tpu_custom_call.1} parent=43 // pred_region
          %798 = vsyncadd [#allocation9], 0
          %s800 = sshll.u32 [#allocation8], 4
          %s801 = int_to_ptr.vmem [resolvable:$true] %s800
          %s802 = sshll.u32 %s6, 4
          %s803 = int_to_ptr.hbm [resolvable:$true] %s802
          %805 = dma.vmem_to_hbm [thread:$0]  %s801, 128, %s803, [#allocation9]
        $region56: #{tpu_custom_call.1} parent=43 // pred_fallthru
          _
        // Predicated region
        $region57: #{tpu_custom_call.1} parent=43 // pred_check
          %p806 = pneg %p172
        $region58: #{tpu_custom_call.1} parent=43 // pred_check_branch
          %808 = sbr.rel (%p806) target = $region60
        $region59: #{tpu_custom_call.1} parent=43 // pred_region
          %810 = dma.done [#allocation9], 128
        $region60: #{tpu_custom_call.1} parent=43 // pred_fallthru
          _
      $region44: #{tpu_custom_call.1} parent=5 // pred_fallthru
        _
      %p811 = scmp.le.s32.totalorder 2, %s13
      // Predicated region
      $region61: #{tpu_custom_call.1} parent=5 // pred_check
        %p812 = pneg %p811
      $region62: #{tpu_custom_call.1} parent=5 // pred_check_branch
        %814 = sbr.rel (%p812) target = $region64
      $region63: #{tpu_custom_call.1} parent=5 // pred_region
        %s815 = ssub.s32 %s13, 2
      $region64: #{tpu_custom_call.1} parent=5 // pred_fallthru
        _
    $region6: #{tpu_custom_call.1} parent=1 // loop_footer
      %s17 = sadd.s32 1, %s13
    $region7: #{tpu_custom_call.1} parent=1 // loop_footer_branch
      %12 = sbr.rel target = $region3
    $region8: #{tpu_custom_call.1} parent=1 // loop_exit
      _
    %816 = vsyncpa [#allocation9], 1
    %s817 = scalar_lea.sflag [#allocation9], 1
    %818 = vsyncpa %s817, 1

</llo_original>
